<compile_context>
chip_gen: v7x
topology: tpu7x:2x2x1
jax: 0.10.0
libtpu: 0.0.40
codegen_flags: <defaults>
</compile_context>

<pallas_src>
import functools

import jax
import jax.numpy as jnp
import numpy as np
from jax.experimental import pallas as pl
from jax.experimental.pallas import tpu as pltpu


# ----------------------------------------------------------------------------
# Fused Pallas kernel:  conv1 + ReLU + BN1  ->  conv2 + ReLU + BN2  ->  maxpool
# ----------------------------------------------------------------------------
def _make_fused_kernel(H, W, Cin, Cout):
    HW = H * W
    Ph = H // 2

    def kernel(x_ref, w1_ref, w2_ref, bn_ref, msk_ref,
               y_ref, pool_ref, stk1_ref, stk2_ref):
        msk = msk_ref[...]          # (9, HW) 0/1 zero-padding masks, one per tap
        bn = bn_ref[...]            # (Cout, 8): [b1, s1, t1, b2, s2, t2, 0, 0]

        def stack_taps(src, scr, c):
            # Build the (9*c, HW) stacked operand for ONE fused MXU matmul:
            # row tap*c + ci holds the (ky,kx)-shifted, boundary-masked channel.
            # Rolls (XLU) and mask-muls (VPU) are paid once per tap.
            for ky in range(3):
                for kx in range(3):
                    tap = ky * 3 + kx
                    off = (ky - 1) * W + (kx - 1)
                    v = src if off == 0 else pltpu.roll(
                        src, shift=(-off) % HW, axis=1)
                    if tap != 4:                      # centre tap: mask is all-1
                        v = v * msk[tap:tap + 1, :]
                    scr[tap * c:(tap + 1) * c, :] = v

        # ---- block1: Conv3x3 (one matmul, K = 9*Cin) -> +bias -> ReLU -> BN --
        stack_taps(x_ref[0], stk1_ref, Cin)
        z = jnp.dot(w1_ref[...], stk1_ref[...],
                    preferred_element_type=jnp.float32)
        z1 = jnp.maximum(z + bn[:, 0:1], 0.0) * bn[:, 1:2] + bn[:, 2:3]

        # ---- block2: Conv3x3 (one matmul, K = 9*Cout) -> +bias -> ReLU -> BN -
        # (Dropout2d is identity in eval mode.)
        stack_taps(z1, stk2_ref, Cout)
        z = jnp.dot(w2_ref[...], stk2_ref[...],
                    preferred_element_type=jnp.float32)
        z2 = jnp.maximum(z + bn[:, 3:4], 0.0) * bn[:, 4:5] + bn[:, 5:6]

        y_ref[0] = z2.astype(y_ref.dtype)            # lane-dense (Cout, H*W)

        # ---- 2x2 maxpool: pairwise max along x then y via XLU rolls (cyclic
        # wrap only touches lanes that are discarded). Keep the even rows only
        # -> one lane-dense (Cout, Ph*W) store; the remaining stride-2 column
        # pick is a tiny reshape+slice on the 4x-smaller result in the wrapper.
        m = jnp.maximum(z2, pltpu.roll(z2, shift=HW - 1, axis=1))   # x[i+1]
        mm = jnp.maximum(m, pltpu.roll(m, shift=HW - W, axis=1))    # x[i+W]
        pool_ref[0] = jnp.concatenate(
            [mm[:, 2 * ph * W: 2 * ph * W + W] for ph in range(Ph)],
            axis=1).astype(pool_ref.dtype)

    return kernel


# ----------------------------------------------------------------------------
# Host-side constants (built once per (H, W) at trace time) — tiny, O(H*W)
# ----------------------------------------------------------------------------
@functools.lru_cache(maxsize=None)
def _tap_masks(H, W):
    """mask[ky*3+kx, h*W+w] == 1 iff (h+ky-1, w+kx-1) lies inside the image,
    i.e. the tap does not read the zero padding of a 3x3 / pad=1 conv."""
    hh, ww = np.meshgrid(np.arange(H), np.arange(W), indexing="ij")
    m = np.zeros((9, H * W), np.float32)
    for ky in range(3):
        for kx in range(3):
            ok = ((hh + ky - 1 >= 0) & (hh + ky - 1 < H) &
                  (ww + kx - 1 >= 0) & (ww + kx - 1 < W))
            m[ky * 3 + kx] = ok.reshape(-1).astype(np.float32)
    return m


# ----------------------------------------------------------------------------
# Full ConvBlock forward (NCHW in / NCHW out, matching PyTorch)
# ----------------------------------------------------------------------------
@jax.jit
def conv_block_forward(x_nchw, params):
    N, Cin, H, W = x_nchw.shape
    Cout = params["b1"].shape[0]
    assert H % 2 == 0 and W % 2 == 0      # MaxPool2d(2), even spatial dims
    HW = H * W
    Ph, Pw = H // 2, W // 2

    # Compact (C, H*W) layout: free reshape, no spatial padding anywhere.
    x_flat = x_nchw.astype(jnp.float32).reshape(N, Cin, HW)

    # OIHW -> (Cout, 9*Cin) with contraction index = (ky*3+kx)*Cin + cin.
    w1m = jnp.transpose(params["w1"], (0, 2, 3, 1)).reshape(Cout, 9 * Cin)
    w2m = jnp.transpose(params["w2"], (0, 2, 3, 1)).reshape(Cout, 9 * Cout)

    # Coalesce bias / BN scale / BN shift of both blocks into one (Cout, 8).
    zero = jnp.zeros_like(params["b1"])
    bn = jnp.stack([params["b1"], params["s1"], params["t1"],
                    params["b2"], params["s2"], params["t2"], zero, zero],
                   axis=1)

    masks = jnp.asarray(_tap_masks(H, W))

    kernel = _make_fused_kernel(H, W, Cin, Cout)

    y_flat, pool_half = pl.pallas_call(
        kernel,
        out_shape=(jax.ShapeDtypeStruct((N, Cout, HW), jnp.float32),
                   jax.ShapeDtypeStruct((N, Cout, Ph * W), jnp.float32)),
        grid=(N,),
        in_specs=[
            pl.BlockSpec((1, Cin, HW), lambda i: (i, 0, 0)),     # image
            pl.BlockSpec((Cout, 9 * Cin), lambda i: (0, 0)),     # conv1 weights
            pl.BlockSpec((Cout, 9 * Cout), lambda i: (0, 0)),    # conv2 weights
            pl.BlockSpec((Cout, 8), lambda i: (0, 0)),           # bias/BN params
            pl.BlockSpec((9, HW), lambda i: (0, 0)),             # tap masks
        ],
        out_specs=(pl.BlockSpec((1, Cout, HW), lambda i: (i, 0, 0)),
                   pl.BlockSpec((1, Cout, Ph * W), lambda i: (i, 0, 0))),
        scratch_shapes=[pltpu.VMEM((9 * Cin, HW), jnp.float32),
                        pltpu.VMEM((9 * Cout, HW), jnp.float32)],
        compiler_params=pltpu.CompilerParams(
            dimension_semantics=("parallel",)),
    )(x_flat, w1m, w2m, bn, masks)

    y = y_flat.reshape(N, Cout, H, W)                       # free reshape
    pooled = pool_half.reshape(N, Cout, Ph, Pw, 2)[..., 0]  # tiny strided pick
    return pooled, y


# ----------------------------------------------------------------------------
# Parameter setup (deterministic, mirrors the nn.Module __init__ shapes)
# ----------------------------------------------------------------------------
def make_params(key, in_size, out_size, eps=1e-5):
    keys = jax.random.split(key, 12)

    def conv_params(kw, kb, cin, cout):
        w = jax.random.normal(kw, (cout, cin, 3, 3), jnp.float32) * 0.2  # OIHW
        b = jax.random.normal(kb, (cout,), jnp.float32) * 0.1
        return w, b

    def bn_params(kg, kb, km, kv, cout):
        gamma = 1.0 + 0.1 * jax.random.normal(kg, (cout,), jnp.float32)
        beta = 0.1 * jax.random.normal(kb, (cout,), jnp.float32)
        mean = 0.1 * jax.random.normal(km, (cout,), jnp.float32)
        var = jax.random.uniform(kv, (cout,), jnp.float32, 0.5, 1.5)
        scale = gamma / jnp.sqrt(var + eps)
        shift = beta - mean * scale
        return gamma, beta, mean, var, scale, shift

    w1, b1 = conv_params(keys[0], keys[1], in_size, out_size)
    g1, be1, m1, v1, s1, t1 = bn_params(keys[2], keys[3], keys[4], keys[5], out_size)
    w2, b2 = conv_params(keys[6], keys[7], out_size, out_size)
    g2, be2, m2, v2, s2, t2 = bn_params(keys[8], keys[9], keys[10], keys[11], out_size)

    return dict(w1=w1, b1=b1, g1=g1, be1=be1, m1=m1, v1=v1, s1=s1, t1=t1,
                w2=w2, b2=b2, g2=g2, be2=be2, m2=m2, v2=v2, s2=s2, t2=t2)


# ----------------------------------------------------------------------------
# Pure-JAX reference (mirrors PyTorch eval-mode forward) for verification
# ----------------------------------------------------------------------------
def reference_forward(x_nchw, params, eps=1e-5):
    def block(x, w, b, gamma, beta, mean, var):
        y = jax.lax.conv_general_dilated(
            x, w, window_strides=(1, 1), padding=((1, 1), (1, 1)),
            dimension_numbers=("NCHW", "OIHW", "NCHW"))
        y = y + b[None, :, None, None]
        y = jnp.maximum(y, 0.0)
        y = ((y - mean[None, :, None, None])
             / jnp.sqrt(var[None, :, None, None] + eps)
             * gamma[None, :, None, None] + beta[None, :, None, None])
        return y

    y = block(x_nchw, params["w1"], params["b1"], params["g1"], params["be1"],
              params["m1"], params["v1"])
    y = block(y, params["w2"], params["b2"], params["g2"], params["be2"],
              params["m2"], params["v2"])
    pooled = jax.lax.reduce_window(
        y, -jnp.inf, jax.lax.max,
        window_dimensions=(1, 1, 2, 2), window_strides=(1, 1, 2, 2),
        padding="VALID")
    return pooled, y


if __name__ == "__main__":
    key = jax.random.PRNGKey(0)
    k_x, k_p = jax.random.split(key)

    N, Cin, Cout, H, W = 2, 4, 8, 16, 16
    x = jax.random.normal(k_x, (N, Cin, H, W), jnp.float32)   # NCHW like PyTorch
    params = make_params(k_p, Cin, Cout)

    pooled, y = conv_block_forward(x, params)
    pooled = jax.block_until_ready(pooled)
    y = jax.block_until_ready(y)

    pooled_ref, y_ref = reference_forward(x, params)

    assert pooled.shape == (N, Cout, H // 2, W // 2), pooled.shape
    assert y.shape == (N, Cout, H, W), y.shape
    np.testing.assert_allclose(np.asarray(y), np.asarray(y_ref), rtol=1e-4, atol=1e-4)
    np.testing.assert_allclose(np.asarray(pooled), np.asarray(pooled_ref),
                               rtol=1e-4, atol=1e-4)

    print("KERNEL_OK")
</pallas_src>

<mosaic_0001>
module attributes {stable_mosaic.version = 11 : i64} {
  func.func @kernel(%arg0: i32, %arg1: memref<1x4x256xf32, #tpu.memory_space<vmem>>, %arg2: memref<8x36xf32, #tpu.memory_space<vmem>>, %arg3: memref<8x72xf32, #tpu.memory_space<vmem>>, %arg4: memref<8x8xf32, #tpu.memory_space<vmem>>, %arg5: memref<9x256xf32, #tpu.memory_space<vmem>>, %arg6: memref<1x8x256xf32, #tpu.memory_space<vmem>>, %arg7: memref<1x8x128xf32, #tpu.memory_space<vmem>>, %arg8: memref<36x256xf32, #tpu.memory_space<vmem>>, %arg9: memref<72x256xf32, #tpu.memory_space<vmem>>) attributes {dimension_semantics = [#tpu.dimension_semantics<parallel>], iteration_bounds = array<i64: 2>, scalar_prefetch = 0 : i64, scratch_operands = 2 : i64, tpu.core_type = #tpu.core_type<tc>, window_params = [{transform_indices = @transform_0, window_bounds = array<i64: 1, 4, 256>}, {pipeline_mode = #tpu.pipeline_mode<synchronous>, transform_indices = @transform_1, window_bounds = array<i64: 8, 36>}, {pipeline_mode = #tpu.pipeline_mode<synchronous>, transform_indices = @transform_2, window_bounds = array<i64: 8, 72>}, {pipeline_mode = #tpu.pipeline_mode<synchronous>, transform_indices = @transform_3, window_bounds = array<i64: 8, 8>}, {pipeline_mode = #tpu.pipeline_mode<synchronous>, transform_indices = @transform_4, window_bounds = array<i64: 9, 256>}, {transform_indices = @transform_5, window_bounds = array<i64: 1, 8, 256>}, {transform_indices = @transform_6, window_bounds = array<i64: 1, 8, 128>}]} {
    %c0 = arith.constant 0 : index
    %c0_0 = arith.constant 0 : index
    %0 = vector.load %arg5[%c0, %c0_0] : memref<9x256xf32, #tpu.memory_space<vmem>>, vector<9x256xf32>
    %c0_1 = arith.constant 0 : index
    %c0_2 = arith.constant 0 : index
    %1 = vector.load %arg4[%c0_1, %c0_2] : memref<8x8xf32, #tpu.memory_space<vmem>>, vector<8x8xf32>
    %c0_3 = arith.constant 0 : index
    %c0_4 = arith.constant 0 : index
    %c0_5 = arith.constant 0 : index
    %2 = vector.load %arg1[%c0_3, %c0_4, %c0_5] : memref<1x4x256xf32, #tpu.memory_space<vmem>>, vector<1x4x256xf32>
    %3 = vector.shape_cast %2 : vector<1x4x256xf32> to vector<4x256xf32>
    %c17_i32 = arith.constant 17 : i32
    %4 = tpu.dynamic_rotate %3 by %c17_i32 dim 1 : vector<4x256xf32>, i32 -> vector<4x256xf32>
    %5 = vector.extract_strided_slice %0 {offsets = [0, 0], sizes = [1, 256], strides = [1, 1]} : vector<9x256xf32> to vector<1x256xf32>
    %6 = vector.broadcast %5 : vector<1x256xf32> to vector<4x256xf32>
    %7 = arith.mulf %4, %6 : vector<4x256xf32>
    %c0_6 = arith.constant 0 : index
    %c0_7 = arith.constant 0 : index
    %8 = vector.load %arg8[%c0_6, %c0_7] : memref<36x256xf32, #tpu.memory_space<vmem>>, vector<4x256xf32>
    tpu.vector_store %arg8[%c0_6, %c0_7], %7 {strides = array<i32>} : memref<36x256xf32, #tpu.memory_space<vmem>>, vector<4x256xf32>,
    %c16_i32 = arith.constant 16 : i32
    %9 = tpu.dynamic_rotate %3 by %c16_i32 dim 1 : vector<4x256xf32>, i32 -> vector<4x256xf32>
    %10 = vector.extract_strided_slice %0 {offsets = [1, 0], sizes = [1, 256], strides = [1, 1]} : vector<9x256xf32> to vector<1x256xf32>
    %11 = vector.broadcast %10 : vector<1x256xf32> to vector<4x256xf32>
    %12 = arith.mulf %9, %11 : vector<4x256xf32>
    %c4 = arith.constant 4 : index
    %c0_8 = arith.constant 0 : index
    %13 = vector.load %arg8[%c4, %c0_8] : memref<36x256xf32, #tpu.memory_space<vmem>>, vector<4x256xf32>
    tpu.vector_store %arg8[%c4, %c0_8], %12 {strides = array<i32>} : memref<36x256xf32, #tpu.memory_space<vmem>>, vector<4x256xf32>,
    %c15_i32 = arith.constant 15 : i32
    %14 = tpu.dynamic_rotate %3 by %c15_i32 dim 1 : vector<4x256xf32>, i32 -> vector<4x256xf32>
    %15 = vector.extract_strided_slice %0 {offsets = [2, 0], sizes = [1, 256], strides = [1, 1]} : vector<9x256xf32> to vector<1x256xf32>
    %16 = vector.broadcast %15 : vector<1x256xf32> to vector<4x256xf32>
    %17 = arith.mulf %14, %16 : vector<4x256xf32>
    %c8 = arith.constant 8 : index
    %c0_9 = arith.constant 0 : index
    %18 = vector.load %arg8[%c8, %c0_9] : memref<36x256xf32, #tpu.memory_space<vmem>>, vector<4x256xf32>
    tpu.vector_store %arg8[%c8, %c0_9], %17 {strides = array<i32>} : memref<36x256xf32, #tpu.memory_space<vmem>>, vector<4x256xf32>,
    %c1_i32 = arith.constant 1 : i32
    %19 = tpu.dynamic_rotate %3 by %c1_i32 dim 1 : vector<4x256xf32>, i32 -> vector<4x256xf32>
    %20 = vector.extract_strided_slice %0 {offsets = [3, 0], sizes = [1, 256], strides = [1, 1]} : vector<9x256xf32> to vector<1x256xf32>
    %21 = vector.broadcast %20 : vector<1x256xf32> to vector<4x256xf32>
    %22 = arith.mulf %19, %21 : vector<4x256xf32>
    %c12 = arith.constant 12 : index
    %c0_10 = arith.constant 0 : index
    %23 = vector.load %arg8[%c12, %c0_10] : memref<36x256xf32, #tpu.memory_space<vmem>>, vector<4x256xf32>
    tpu.vector_store %arg8[%c12, %c0_10], %22 {strides = array<i32>} : memref<36x256xf32, #tpu.memory_space<vmem>>, vector<4x256xf32>,
    %c16 = arith.constant 16 : index
    %c0_11 = arith.constant 0 : index
    %24 = vector.load %arg8[%c16, %c0_11] : memref<36x256xf32, #tpu.memory_space<vmem>>, vector<4x256xf32>
    tpu.vector_store %arg8[%c16, %c0_11], %3 {strides = array<i32>} : memref<36x256xf32, #tpu.memory_space<vmem>>, vector<4x256xf32>,
    %c255_i32 = arith.constant 255 : i32
    %25 = tpu.dynamic_rotate %3 by %c255_i32 dim 1 : vector<4x256xf32>, i32 -> vector<4x256xf32>
    %26 = vector.extract_strided_slice %0 {offsets = [5, 0], sizes = [1, 256], strides = [1, 1]} : vector<9x256xf32> to vector<1x256xf32>
    %27 = vector.broadcast %26 : vector<1x256xf32> to vector<4x256xf32>
    %28 = arith.mulf %25, %27 : vector<4x256xf32>
    %c20 = arith.constant 20 : index
    %c0_12 = arith.constant 0 : index
    %29 = vector.load %arg8[%c20, %c0_12] : memref<36x256xf32, #tpu.memory_space<vmem>>, vector<4x256xf32>
    tpu.vector_store %arg8[%c20, %c0_12], %28 {strides = array<i32>} : memref<36x256xf32, #tpu.memory_space<vmem>>, vector<4x256xf32>,
    %c241_i32 = arith.constant 241 : i32
    %30 = tpu.dynamic_rotate %3 by %c241_i32 dim 1 : vector<4x256xf32>, i32 -> vector<4x256xf32>
    %31 = vector.extract_strided_slice %0 {offsets = [6, 0], sizes = [1, 256], strides = [1, 1]} : vector<9x256xf32> to vector<1x256xf32>
    %32 = vector.broadcast %31 : vector<1x256xf32> to vector<4x256xf32>
    %33 = arith.mulf %30, %32 : vector<4x256xf32>
    %c24 = arith.constant 24 : index
    %c0_13 = arith.constant 0 : index
    %34 = vector.load %arg8[%c24, %c0_13] : memref<36x256xf32, #tpu.memory_space<vmem>>, vector<4x256xf32>
    tpu.vector_store %arg8[%c24, %c0_13], %33 {strides = array<i32>} : memref<36x256xf32, #tpu.memory_space<vmem>>, vector<4x256xf32>,
    %c240_i32 = arith.constant 240 : i32
    %35 = tpu.dynamic_rotate %3 by %c240_i32 dim 1 : vector<4x256xf32>, i32 -> vector<4x256xf32>
    %36 = vector.extract_strided_slice %0 {offsets = [7, 0], sizes = [1, 256], strides = [1, 1]} : vector<9x256xf32> to vector<1x256xf32>
    %37 = vector.broadcast %36 : vector<1x256xf32> to vector<4x256xf32>
    %38 = arith.mulf %35, %37 : vector<4x256xf32>
    %c28 = arith.constant 28 : index
    %c0_14 = arith.constant 0 : index
    %39 = vector.load %arg8[%c28, %c0_14] : memref<36x256xf32, #tpu.memory_space<vmem>>, vector<4x256xf32>
    tpu.vector_store %arg8[%c28, %c0_14], %38 {strides = array<i32>} : memref<36x256xf32, #tpu.memory_space<vmem>>, vector<4x256xf32>,
    %c239_i32 = arith.constant 239 : i32
    %40 = tpu.dynamic_rotate %3 by %c239_i32 dim 1 : vector<4x256xf32>, i32 -> vector<4x256xf32>
    %41 = vector.extract_strided_slice %0 {offsets = [8, 0], sizes = [1, 256], strides = [1, 1]} : vector<9x256xf32> to vector<1x256xf32>
    %42 = vector.broadcast %41 : vector<1x256xf32> to vector<4x256xf32>
    %43 = arith.mulf %40, %42 : vector<4x256xf32>
    %c32 = arith.constant 32 : index
    %c0_15 = arith.constant 0 : index
    %44 = vector.load %arg8[%c32, %c0_15] : memref<36x256xf32, #tpu.memory_space<vmem>>, vector<4x256xf32>
    tpu.vector_store %arg8[%c32, %c0_15], %43 {strides = array<i32>} : memref<36x256xf32, #tpu.memory_space<vmem>>, vector<4x256xf32>,
    %c0_16 = arith.constant 0 : index
    %c0_17 = arith.constant 0 : index
    %45 = vector.load %arg2[%c0_16, %c0_17] : memref<8x36xf32, #tpu.memory_space<vmem>>, vector<8x36xf32>
    %c0_18 = arith.constant 0 : index
    %c0_19 = arith.constant 0 : index
    %46 = vector.load %arg8[%c0_18, %c0_19] : memref<36x256xf32, #tpu.memory_space<vmem>>, vector<36x256xf32>
    %cst = arith.constant dense<0.000000e+00> : vector<8x256xf32>
    %47 = tpu.matmul %45, %46, %cst {dimension_numbers = #tpu.dot_dimension_numbers<[1], [0], [0], [1], [0, 0, 1, 1], [], []>} : vector<8x36xf32>, vector<36x256xf32>, vector<8x256xf32> -> vector<8x256xf32>
    %48 = vector.extract_strided_slice %1 {offsets = [0, 0], sizes = [8, 1], strides = [1, 1]} : vector<8x8xf32> to vector<8x1xf32>
    %49 = vector.broadcast %48 : vector<8x1xf32> to vector<8x256xf32>
    %50 = arith.addf %47, %49 : vector<8x256xf32>
    %cst_20 = arith.constant 0.000000e+00 : f32
    %51 = vector.broadcast %cst_20 : f32 to vector<8x256xf32>
    %52 = arith.maximumf %50, %51 : vector<8x256xf32>
    %53 = vector.extract_strided_slice %1 {offsets = [0, 1], sizes = [8, 1], strides = [1, 1]} : vector<8x8xf32> to vector<8x1xf32>
    %54 = vector.broadcast %53 : vector<8x1xf32> to vector<8x256xf32>
    %55 = arith.mulf %52, %54 : vector<8x256xf32>
    %56 = vector.extract_strided_slice %1 {offsets = [0, 2], sizes = [8, 1], strides = [1, 1]} : vector<8x8xf32> to vector<8x1xf32>
    %57 = vector.broadcast %56 : vector<8x1xf32> to vector<8x256xf32>
    %58 = arith.addf %55, %57 : vector<8x256xf32>
    %c17_i32_21 = arith.constant 17 : i32
    %59 = tpu.dynamic_rotate %58 by %c17_i32_21 dim 1 : vector<8x256xf32>, i32 -> vector<8x256xf32>
    %60 = vector.extract_strided_slice %0 {offsets = [0, 0], sizes = [1, 256], strides = [1, 1]} : vector<9x256xf32> to vector<1x256xf32>
    %61 = vector.broadcast %60 : vector<1x256xf32> to vector<8x256xf32>
    %62 = arith.mulf %59, %61 : vector<8x256xf32>
    %c0_22 = arith.constant 0 : index
    %c0_23 = arith.constant 0 : index
    %63 = vector.load %arg9[%c0_22, %c0_23] : memref<72x256xf32, #tpu.memory_space<vmem>>, vector<8x256xf32>
    tpu.vector_store %arg9[%c0_22, %c0_23], %62 {strides = array<i32>} : memref<72x256xf32, #tpu.memory_space<vmem>>, vector<8x256xf32>,
    %c16_i32_24 = arith.constant 16 : i32
    %64 = tpu.dynamic_rotate %58 by %c16_i32_24 dim 1 : vector<8x256xf32>, i32 -> vector<8x256xf32>
    %65 = vector.extract_strided_slice %0 {offsets = [1, 0], sizes = [1, 256], strides = [1, 1]} : vector<9x256xf32> to vector<1x256xf32>
    %66 = vector.broadcast %65 : vector<1x256xf32> to vector<8x256xf32>
    %67 = arith.mulf %64, %66 : vector<8x256xf32>
    %c8_25 = arith.constant 8 : index
    %c0_26 = arith.constant 0 : index
    %68 = vector.load %arg9[%c8_25, %c0_26] : memref<72x256xf32, #tpu.memory_space<vmem>>, vector<8x256xf32>
    tpu.vector_store %arg9[%c8_25, %c0_26], %67 {strides = array<i32>} : memref<72x256xf32, #tpu.memory_space<vmem>>, vector<8x256xf32>,
    %c15_i32_27 = arith.constant 15 : i32
    %69 = tpu.dynamic_rotate %58 by %c15_i32_27 dim 1 : vector<8x256xf32>, i32 -> vector<8x256xf32>
    %70 = vector.extract_strided_slice %0 {offsets = [2, 0], sizes = [1, 256], strides = [1, 1]} : vector<9x256xf32> to vector<1x256xf32>
    %71 = vector.broadcast %70 : vector<1x256xf32> to vector<8x256xf32>
    %72 = arith.mulf %69, %71 : vector<8x256xf32>
    %c16_28 = arith.constant 16 : index
    %c0_29 = arith.constant 0 : index
    %73 = vector.load %arg9[%c16_28, %c0_29] : memref<72x256xf32, #tpu.memory_space<vmem>>, vector<8x256xf32>
    tpu.vector_store %arg9[%c16_28, %c0_29], %72 {strides = array<i32>} : memref<72x256xf32, #tpu.memory_space<vmem>>, vector<8x256xf32>,
    %c1_i32_30 = arith.constant 1 : i32
    %74 = tpu.dynamic_rotate %58 by %c1_i32_30 dim 1 : vector<8x256xf32>, i32 -> vector<8x256xf32>
    %75 = vector.extract_strided_slice %0 {offsets = [3, 0], sizes = [1, 256], strides = [1, 1]} : vector<9x256xf32> to vector<1x256xf32>
    %76 = vector.broadcast %75 : vector<1x256xf32> to vector<8x256xf32>
    %77 = arith.mulf %74, %76 : vector<8x256xf32>
    %c24_31 = arith.constant 24 : index
    %c0_32 = arith.constant 0 : index
    %78 = vector.load %arg9[%c24_31, %c0_32] : memref<72x256xf32, #tpu.memory_space<vmem>>, vector<8x256xf32>
    tpu.vector_store %arg9[%c24_31, %c0_32], %77 {strides = array<i32>} : memref<72x256xf32, #tpu.memory_space<vmem>>, vector<8x256xf32>,
    %c32_33 = arith.constant 32 : index
    %c0_34 = arith.constant 0 : index
    %79 = vector.load %arg9[%c32_33, %c0_34] : memref<72x256xf32, #tpu.memory_space<vmem>>, vector<8x256xf32>
    tpu.vector_store %arg9[%c32_33, %c0_34], %58 {strides = array<i32>} : memref<72x256xf32, #tpu.memory_space<vmem>>, vector<8x256xf32>,
    %c255_i32_35 = arith.constant 255 : i32
    %80 = tpu.dynamic_rotate %58 by %c255_i32_35 dim 1 : vector<8x256xf32>, i32 -> vector<8x256xf32>
    %81 = vector.extract_strided_slice %0 {offsets = [5, 0], sizes = [1, 256], strides = [1, 1]} : vector<9x256xf32> to vector<1x256xf32>
    %82 = vector.broadcast %81 : vector<1x256xf32> to vector<8x256xf32>
    %83 = arith.mulf %80, %82 : vector<8x256xf32>
    %c40 = arith.constant 40 : index
    %c0_36 = arith.constant 0 : index
    %84 = vector.load %arg9[%c40, %c0_36] : memref<72x256xf32, #tpu.memory_space<vmem>>, vector<8x256xf32>
    tpu.vector_store %arg9[%c40, %c0_36], %83 {strides = array<i32>} : memref<72x256xf32, #tpu.memory_space<vmem>>, vector<8x256xf32>,
    %c241_i32_37 = arith.constant 241 : i32
    %85 = tpu.dynamic_rotate %58 by %c241_i32_37 dim 1 : vector<8x256xf32>, i32 -> vector<8x256xf32>
    %86 = vector.extract_strided_slice %0 {offsets = [6, 0], sizes = [1, 256], strides = [1, 1]} : vector<9x256xf32> to vector<1x256xf32>
    %87 = vector.broadcast %86 : vector<1x256xf32> to vector<8x256xf32>
    %88 = arith.mulf %85, %87 : vector<8x256xf32>
    %c48 = arith.constant 48 : index
    %c0_38 = arith.constant 0 : index
    %89 = vector.load %arg9[%c48, %c0_38] : memref<72x256xf32, #tpu.memory_space<vmem>>, vector<8x256xf32>
    tpu.vector_store %arg9[%c48, %c0_38], %88 {strides = array<i32>} : memref<72x256xf32, #tpu.memory_space<vmem>>, vector<8x256xf32>,
    %c240_i32_39 = arith.constant 240 : i32
    %90 = tpu.dynamic_rotate %58 by %c240_i32_39 dim 1 : vector<8x256xf32>, i32 -> vector<8x256xf32>
    %91 = vector.extract_strided_slice %0 {offsets = [7, 0], sizes = [1, 256], strides = [1, 1]} : vector<9x256xf32> to vector<1x256xf32>
    %92 = vector.broadcast %91 : vector<1x256xf32> to vector<8x256xf32>
    %93 = arith.mulf %90, %92 : vector<8x256xf32>
    %c56 = arith.constant 56 : index
    %c0_40 = arith.constant 0 : index
    %94 = vector.load %arg9[%c56, %c0_40] : memref<72x256xf32, #tpu.memory_space<vmem>>, vector<8x256xf32>
    tpu.vector_store %arg9[%c56, %c0_40], %93 {strides = array<i32>} : memref<72x256xf32, #tpu.memory_space<vmem>>, vector<8x256xf32>,
    %c239_i32_41 = arith.constant 239 : i32
    %95 = tpu.dynamic_rotate %58 by %c239_i32_41 dim 1 : vector<8x256xf32>, i32 -> vector<8x256xf32>
    %96 = vector.extract_strided_slice %0 {offsets = [8, 0], sizes = [1, 256], strides = [1, 1]} : vector<9x256xf32> to vector<1x256xf32>
    %97 = vector.broadcast %96 : vector<1x256xf32> to vector<8x256xf32>
    %98 = arith.mulf %95, %97 : vector<8x256xf32>
    %c64 = arith.constant 64 : index
    %c0_42 = arith.constant 0 : index
    %99 = vector.load %arg9[%c64, %c0_42] : memref<72x256xf32, #tpu.memory_space<vmem>>, vector<8x256xf32>
    tpu.vector_store %arg9[%c64, %c0_42], %98 {strides = array<i32>} : memref<72x256xf32, #tpu.memory_space<vmem>>, vector<8x256xf32>,
    %c0_43 = arith.constant 0 : index
    %c0_44 = arith.constant 0 : index
    %100 = vector.load %arg3[%c0_43, %c0_44] : memref<8x72xf32, #tpu.memory_space<vmem>>, vector<8x72xf32>
    %c0_45 = arith.constant 0 : index
    %c0_46 = arith.constant 0 : index
    %101 = vector.load %arg9[%c0_45, %c0_46] : memref<72x256xf32, #tpu.memory_space<vmem>>, vector<72x256xf32>
    %cst_47 = arith.constant dense<0.000000e+00> : vector<8x256xf32>
    %102 = tpu.matmul %100, %101, %cst_47 {dimension_numbers = #tpu.dot_dimension_numbers<[1], [0], [0], [1], [0, 0, 1, 1], [], []>} : vector<8x72xf32>, vector<72x256xf32>, vector<8x256xf32> -> vector<8x256xf32>
    %103 = vector.extract_strided_slice %1 {offsets = [0, 3], sizes = [8, 1], strides = [1, 1]} : vector<8x8xf32> to vector<8x1xf32>
    %104 = vector.broadcast %103 : vector<8x1xf32> to vector<8x256xf32>
    %105 = arith.addf %102, %104 : vector<8x256xf32>
    %cst_48 = arith.constant 0.000000e+00 : f32
    %106 = vector.broadcast %cst_48 : f32 to vector<8x256xf32>
    %107 = arith.maximumf %105, %106 : vector<8x256xf32>
    %108 = vector.extract_strided_slice %1 {offsets = [0, 4], sizes = [8, 1], strides = [1, 1]} : vector<8x8xf32> to vector<8x1xf32>
    %109 = vector.broadcast %108 : vector<8x1xf32> to vector<8x256xf32>
    %110 = arith.mulf %107, %109 : vector<8x256xf32>
    %111 = vector.extract_strided_slice %1 {offsets = [0, 5], sizes = [8, 1], strides = [1, 1]} : vector<8x8xf32> to vector<8x1xf32>
    %112 = vector.broadcast %111 : vector<8x1xf32> to vector<8x256xf32>
    %113 = arith.addf %110, %112 : vector<8x256xf32>
    %c0_49 = arith.constant 0 : index
    %c0_50 = arith.constant 0 : index
    %c0_51 = arith.constant 0 : index
    %114 = vector.load %arg6[%c0_49, %c0_50, %c0_51] : memref<1x8x256xf32, #tpu.memory_space<vmem>>, vector<1x8x256xf32>
    %115 = vector.shape_cast %114 : vector<1x8x256xf32> to vector<8x256xf32>
    %116 = vector.shape_cast %113 : vector<8x256xf32> to vector<1x8x256xf32>
    tpu.vector_store %arg6[%c0_49, %c0_50, %c0_51], %116 {strides = array<i32>} : memref<1x8x256xf32, #tpu.memory_space<vmem>>, vector<1x8x256xf32>,
    %c255_i32_52 = arith.constant 255 : i32
    %117 = tpu.dynamic_rotate %113 by %c255_i32_52 dim 1 : vector<8x256xf32>, i32 -> vector<8x256xf32>
    %118 = arith.maximumf %113, %117 : vector<8x256xf32>
    %c240_i32_53 = arith.constant 240 : i32
    %119 = tpu.dynamic_rotate %118 by %c240_i32_53 dim 1 : vector<8x256xf32>, i32 -> vector<8x256xf32>
    %120 = arith.maximumf %118, %119 : vector<8x256xf32>
    %121 = vector.extract_strided_slice %120 {offsets = [0, 0], sizes = [8, 16], strides = [1, 1]} : vector<8x256xf32> to vector<8x16xf32>
    %122 = vector.extract_strided_slice %120 {offsets = [0, 32], sizes = [8, 16], strides = [1, 1]} : vector<8x256xf32> to vector<8x16xf32>
    %123 = vector.extract_strided_slice %120 {offsets = [0, 64], sizes = [8, 16], strides = [1, 1]} : vector<8x256xf32> to vector<8x16xf32>
    %124 = vector.extract_strided_slice %120 {offsets = [0, 96], sizes = [8, 16], strides = [1, 1]} : vector<8x256xf32> to vector<8x16xf32>
    %125 = vector.extract_strided_slice %120 {offsets = [0, 128], sizes = [8, 16], strides = [1, 1]} : vector<8x256xf32> to vector<8x16xf32>
    %126 = vector.extract_strided_slice %120 {offsets = [0, 160], sizes = [8, 16], strides = [1, 1]} : vector<8x256xf32> to vector<8x16xf32>
    %127 = vector.extract_strided_slice %120 {offsets = [0, 192], sizes = [8, 16], strides = [1, 1]} : vector<8x256xf32> to vector<8x16xf32>
    %128 = vector.extract_strided_slice %120 {offsets = [0, 224], sizes = [8, 16], strides = [1, 1]} : vector<8x256xf32> to vector<8x16xf32>
    %129 = tpu.concatenate %121, %122, %123, %124, %125, %126, %127, %128 in 1 : vector<8x16xf32>, vector<8x16xf32>, vector<8x16xf32>, vector<8x16xf32>, vector<8x16xf32>, vector<8x16xf32>, vector<8x16xf32>, vector<8x16xf32> -> vector<8x128xf32>
    %c0_54 = arith.constant 0 : index
    %c0_55 = arith.constant 0 : index
    %c0_56 = arith.constant 0 : index
    %130 = vector.load %arg7[%c0_54, %c0_55, %c0_56] : memref<1x8x128xf32, #tpu.memory_space<vmem>>, vector<1x8x128xf32>
    %131 = vector.shape_cast %130 : vector<1x8x128xf32> to vector<8x128xf32>
    %132 = vector.shape_cast %129 : vector<8x128xf32> to vector<1x8x128xf32>
    tpu.vector_store %arg7[%c0_54, %c0_55, %c0_56], %132 {strides = array<i32>} : memref<1x8x128xf32, #tpu.memory_space<vmem>>, vector<1x8x128xf32>,
    return
  }
  func.func @transform_0(%arg0: i32) -> (i32, i32, i32) {
    %c0_i32 = arith.constant 0 : i32
    %c0_i32_0 = arith.constant 0 : i32
    %c0_i32_1 = arith.constant 0 : i32
    return %arg0, %c0_i32, %c0_i32_0 : i32, i32, i32
  }
  func.func @transform_1(%arg0: i32) -> (i32, i32) {
    %c0_i32 = arith.constant 0 : i32
    %c0_i32_0 = arith.constant 0 : i32
    %c0_i32_1 = arith.constant 0 : i32
    return %c0_i32, %c0_i32_0 : i32, i32
  }
  func.func @transform_2(%arg0: i32) -> (i32, i32) {
    %c0_i32 = arith.constant 0 : i32
    %c0_i32_0 = arith.constant 0 : i32
    %c0_i32_1 = arith.constant 0 : i32
    return %c0_i32, %c0_i32_0 : i32, i32
  }
  func.func @transform_3(%arg0: i32) -> (i32, i32) {
    %c0_i32 = arith.constant 0 : i32
    %c0_i32_0 = arith.constant 0 : i32
    %c0_i32_1 = arith.constant 0 : i32
    return %c0_i32, %c0_i32_0 : i32, i32
  }
  func.func @transform_4(%arg0: i32) -> (i32, i32) {
    %c0_i32 = arith.constant 0 : i32
    %c0_i32_0 = arith.constant 0 : i32
    %c0_i32_1 = arith.constant 0 : i32
    return %c0_i32, %c0_i32_0 : i32, i32
  }
  func.func @transform_5(%arg0: i32) -> (i32, i32, i32) {
    %c0_i32 = arith.constant 0 : i32
    %c0_i32_0 = arith.constant 0 : i32
    %c0_i32_1 = arith.constant 0 : i32
    return %arg0, %c0_i32, %c0_i32_0 : i32, i32, i32
  }
  func.func @transform_6(%arg0: i32) -> (i32, i32, i32) {
    %c0_i32 = arith.constant 0 : i32
    %c0_i32_0 = arith.constant 0 : i32
    %c0_i32_1 = arith.constant 0 : i32
    return %arg0, %c0_i32, %c0_i32_0 : i32, i32, i32
  }
}

</mosaic_0001>

<llo_original>
// kernel: conv_block_forward.1
$region0: #{conv_block_forward.1}
  #allocation0 [shape = 'u32[]', space=smem, size = 0x4, offset = 0x4, fixed_abs, tag = 'smem constant byte address 0x4 - core index']
  #allocation1 [shape = 'u32[144,128]{1,0:T(1,128)}', space=vmem, size = 0x12000, scoped, tag = 'internal scratch']
  #allocation2 [shape = 'f32[36,256]{1,0:T(8,128)}', space=vmem, size = 0xa000, scoped, tag = 'scratch operand']
  #allocation3 [shape = 'f32[72,256]{1,0:T(8,128)}', space=vmem, size = 0x12000, scoped, tag = 'scratch operand']
  %s0 = inlined_call_operand.vmem [shape: f32[2,4,256], index: 0, kind: input, shape index: {}]
  %s1 = inlined_call_operand.vmem [shape: f32[8,36], index: 1, kind: input, shape index: {}]
  %s2 = inlined_call_operand.vmem [shape: f32[8,72], index: 2, kind: input, shape index: {}]
  %s3 = inlined_call_operand.vmem [shape: f32[8,8], index: 3, kind: input, shape index: {}]
  %s4 = inlined_call_operand.vmem [shape: f32[9,256], index: 4, kind: input, shape index: {}]
  %s5 = inlined_call_operand.vmem [shape: f32[2,8,256], index: 5, kind: output, shape index: {0}]
  %s6 = inlined_call_operand.vmem [shape: f32[2,8,128], index: 6, kind: output, shape index: {1}]
  %7 = xla_tuple %s5, %s6
  %s8 = sld [smem:[#allocation0]]
  $region61: #{conv_block_forward.1} parent=0
    _
  %s10 = ssub.s32 1, %s8
  %s11 = scalar_select 0, %s10, %s8
  loop: start=0, step=1, limit=4
  $region2: #{conv_block_forward.1} parent=0 // loop_pre_header
    _
  $region3: #{conv_block_forward.1} parent=0 // loop_header
    %s13 = sphi 0, %s17
    %p14 = scmp.ge.s32.totalorder %s13, 4
    %s23 = sphi 0, %s25
    %s26 = sphi 0, %s23
    %s27 = sphi 0, %s26
    %s43 = sphi 0, %s27
    %s47 = sphi 0, %s47
    %s49 = sphi 0, %s47
    %s50 = sphi 0, %s49
    %s64 = sphi 0, %s50
    %s68 = sphi 0, %s68
    %s70 = sphi 0, %s68
    %s71 = sphi 0, %s70
    %s85 = sphi 0, %s71
    %s89 = sphi 0, %s89
    %s91 = sphi 0, %s89
    %s92 = sphi 0, %s91
    %s106 = sphi 0, %s92
    %s110 = sphi 0, %s110
    %s112 = sphi 0, %s110
    %s113 = sphi 0, %s112
    %s127 = sphi 0, %s113
    %s133 = sphi 0, %s135
    %s136 = sphi 0, %s133
    %s137 = sphi 0, %s136
    %s153 = sphi 0, %s137
    %s159 = sphi 0, %s161
    %s162 = sphi 0, %s159
    %s163 = sphi 0, %s162
    %s179 = sphi 0, %s163
  $region4: #{conv_block_forward.1} parent=0 // loop_header_branch
    %16 = sbr.rel (%p14) target = $region8
  $region5: #{conv_block_forward.1} parent=0 // loop_body
    %s18 = ssub.s32 %s13, 1
    %s19 = ssub.s32 %s13, 2
    %s20 = sadd.s32 %s13, 1
    %s21 = ssub.s32 %s13, %s20
    %p22 = scmp.eq.s32.totalorder %s21, 0
    %s24 = sadd.s32 %s23, 1
    %s25 = scalar_select %p22, %s23, %s24
    %p28 = pneg %p22
    %p29 = scmp.eq.s32.totalorder %s13, 1
    %p30 = por %p28, %p29
    %p31 = scmp.ne.s32.totalorder %s23, %s26
    %p32 = scmp.eq.s32.totalorder %s13, 0
    %p33 = por %p31, %p32
    %p34 = scmp.ne.s32.totalorder %s23, %s26
    %p35 = scmp.eq.s32.totalorder %s18, 1
    %p36 = por %p34, %p35
    %p37 = scmp.ne.s32.totalorder %s26, %s27
    %p38 = scmp.eq.s32.totalorder %s18, 0
    %p39 = por %p37, %p38
    %p40 = scmp.ne.s32.totalorder %s26, %s27
    %p41 = scmp.eq.s32.totalorder %s19, 1
    %p42 = por %p40, %p41
    %p44 = scmp.ne.s32.totalorder %s27, %s43
    %p45 = scmp.eq.s32.totalorder %s19, 0
    %p46 = por %p44, %p45
    %s48 = sadd.s32 %s47, 1
    %p51 = scmp.eq.s32.totalorder %s13, 1
    %p52 = scmp.ne.s32.totalorder %s47, %s49
    %p53 = scmp.eq.s32.totalorder %s13, 0
    %p54 = por %p52, %p53
    %p55 = scmp.ne.s32.totalorder %s47, %s49
    %p56 = scmp.eq.s32.totalorder %s18, 1
    %p57 = por %p55, %p56
    %p58 = scmp.ne.s32.totalorder %s49, %s50
    %p59 = scmp.eq.s32.totalorder %s18, 0
    %p60 = por %p58, %p59
    %p61 = scmp.ne.s32.totalorder %s49, %s50
    %p62 = scmp.eq.s32.totalorder %s19, 1
    %p63 = por %p61, %p62
    %p65 = scmp.ne.s32.totalorder %s50, %s64
    %p66 = scmp.eq.s32.totalorder %s19, 0
    %p67 = por %p65, %p66
    %s69 = sadd.s32 %s68, 1
    %p72 = scmp.eq.s32.totalorder %s13, 1
    %p73 = scmp.ne.s32.totalorder %s68, %s70
    %p74 = scmp.eq.s32.totalorder %s13, 0
    %p75 = por %p73, %p74
    %p76 = scmp.ne.s32.totalorder %s68, %s70
    %p77 = scmp.eq.s32.totalorder %s18, 1
    %p78 = por %p76, %p77
    %p79 = scmp.ne.s32.totalorder %s70, %s71
    %p80 = scmp.eq.s32.totalorder %s18, 0
    %p81 = por %p79, %p80
    %p82 = scmp.ne.s32.totalorder %s70, %s71
    %p83 = scmp.eq.s32.totalorder %s19, 1
    %p84 = por %p82, %p83
    %p86 = scmp.ne.s32.totalorder %s71, %s85
    %p87 = scmp.eq.s32.totalorder %s19, 0
    %p88 = por %p86, %p87
    %s90 = sadd.s32 %s89, 1
    %p93 = scmp.eq.s32.totalorder %s13, 1
    %p94 = scmp.ne.s32.totalorder %s89, %s91
    %p95 = scmp.eq.s32.totalorder %s13, 0
    %p96 = por %p94, %p95
    %p97 = scmp.ne.s32.totalorder %s89, %s91
    %p98 = scmp.eq.s32.totalorder %s18, 1
    %p99 = por %p97, %p98
    %p100 = scmp.ne.s32.totalorder %s91, %s92
    %p101 = scmp.eq.s32.totalorder %s18, 0
    %p102 = por %p100, %p101
    %p103 = scmp.ne.s32.totalorder %s91, %s92
    %p104 = scmp.eq.s32.totalorder %s19, 1
    %p105 = por %p103, %p104
    %p107 = scmp.ne.s32.totalorder %s92, %s106
    %p108 = scmp.eq.s32.totalorder %s19, 0
    %p109 = por %p107, %p108
    %s111 = sadd.s32 %s110, 1
    %p114 = scmp.eq.s32.totalorder %s13, 1
    %p115 = scmp.ne.s32.totalorder %s110, %s112
    %p116 = scmp.eq.s32.totalorder %s13, 0
    %p117 = por %p115, %p116
    %p118 = scmp.ne.s32.totalorder %s110, %s112
    %p119 = scmp.eq.s32.totalorder %s18, 1
    %p120 = por %p118, %p119
    %p121 = scmp.ne.s32.totalorder %s112, %s113
    %p122 = scmp.eq.s32.totalorder %s18, 0
    %p123 = por %p121, %p122
    %p124 = scmp.ne.s32.totalorder %s112, %s113
    %p125 = scmp.eq.s32.totalorder %s19, 1
    %p126 = por %p124, %p125
    %p128 = scmp.ne.s32.totalorder %s113, %s127
    %p129 = scmp.eq.s32.totalorder %s19, 0
    %p130 = por %p128, %p129
    %s131 = ssub.s32 %s13, %s20
    %p132 = scmp.eq.s32.totalorder %s131, 0
    %s134 = sadd.s32 %s133, 1
    %s135 = scalar_select %p132, %s133, %s134
    %p138 = pneg %p132
    %p139 = scmp.eq.s32.totalorder %s13, 1
    %p140 = por %p138, %p139
    %p141 = scmp.ne.s32.totalorder %s133, %s136
    %p142 = scmp.eq.s32.totalorder %s13, 0
    %p143 = por %p141, %p142
    %p144 = scmp.ne.s32.totalorder %s133, %s136
    %p145 = scmp.eq.s32.totalorder %s18, 1
    %p146 = por %p144, %p145
    %p147 = scmp.ne.s32.totalorder %s136, %s137
    %p148 = scmp.eq.s32.totalorder %s18, 0
    %p149 = por %p147, %p148
    %p150 = scmp.ne.s32.totalorder %s136, %s137
    %p151 = scmp.eq.s32.totalorder %s19, 1
    %p152 = por %p150, %p151
    %p154 = scmp.ne.s32.totalorder %s137, %s153
    %p155 = scmp.eq.s32.totalorder %s19, 0
    %p156 = por %p154, %p155
    %s157 = ssub.s32 %s13, %s20
    %p158 = scmp.eq.s32.totalorder %s157, 0
    %s160 = sadd.s32 %s159, 1
    %s161 = scalar_select %p158, %s159, %s160
    %p164 = pneg %p158
    %p165 = scmp.eq.s32.totalorder %s13, 1
    %p166 = por %p164, %p165
    %p167 = scmp.ne.s32.totalorder %s159, %s162
    %p168 = scmp.eq.s32.totalorder %s13, 0
    %p169 = por %p167, %p168
    %p170 = scmp.ne.s32.totalorder %s159, %s162
    %p171 = scmp.eq.s32.totalorder %s18, 1
    %p172 = por %p170, %p171
    %p173 = scmp.ne.s32.totalorder %s162, %s163
    %p174 = scmp.eq.s32.totalorder %s18, 0
    %p175 = por %p173, %p174
    %p176 = scmp.ne.s32.totalorder %s162, %s163
    %p177 = scmp.eq.s32.totalorder %s19, 1
    %p178 = por %p176, %p177
    %p180 = scmp.ne.s32.totalorder %s163, %s179
    %p181 = scmp.eq.s32.totalorder %s19, 0
    %p182 = por %p180, %p181
    %p183 = scmp.le.s32.totalorder 1, %s13
    %p184 = scmp.lt.s32.totalorder %s13, 3
    %p185 = pnand %p183, %p184
    %p186 = pneg %p185
    // Predicated region
    $region9: #{conv_block_forward.1} parent=5 // pred_check
      _
    $region10: #{conv_block_forward.1} parent=5 // pred_check_branch
      %188 = sbr.rel (%p185) target = $region12
    $region11: #{conv_block_forward.1} parent=5 // pred_region
      %s189 = ssub.s32 %s13, 1
      // Predicated region
      $region13: #{conv_block_forward.1} parent=11 // pred_check
        %p190 = pneg %p60
      $region14: #{conv_block_forward.1} parent=11 // pred_check_branch
        %192 = sbr.rel (%p190) target = $region16
      $region15: #{conv_block_forward.1} parent=11 // pred_region
        _
      $region16: #{conv_block_forward.1} parent=11 // pred_fallthru
        _
      // Predicated region
      $region17: #{conv_block_forward.1} parent=11 // pred_check
        %p193 = pneg %p81
      $region18: #{conv_block_forward.1} parent=11 // pred_check_branch
        %195 = sbr.rel (%p193) target = $region20
      $region19: #{conv_block_forward.1} parent=11 // pred_region
        _
      $region20: #{conv_block_forward.1} parent=11 // pred_fallthru
        _
      // Predicated region
      $region21: #{conv_block_forward.1} parent=11 // pred_check
        %p196 = pneg %p102
      $region22: #{conv_block_forward.1} parent=11 // pred_check_branch
        %198 = sbr.rel (%p196) target = $region24
      $region23: #{conv_block_forward.1} parent=11 // pred_region
        _
      $region24: #{conv_block_forward.1} parent=11 // pred_fallthru
        _
      // Predicated region
      $region25: #{conv_block_forward.1} parent=11 // pred_check
        %p199 = pneg %p123
      $region26: #{conv_block_forward.1} parent=11 // pred_check_branch
        %201 = sbr.rel (%p199) target = $region28
      $region27: #{conv_block_forward.1} parent=11 // pred_region
        _
      $region28: #{conv_block_forward.1} parent=11 // pred_fallthru
        _
    $region12: #{conv_block_forward.1} parent=5 // pred_fallthru
      _
    %p202 = scmp.lt.s32.totalorder %s13, 2
    // Predicated region
    $region29: #{conv_block_forward.1} parent=5 // pred_check
      %p203 = pneg %p202
    $region30: #{conv_block_forward.1} parent=5 // pred_check_branch
      %205 = sbr.rel (%p203) target = $region32
    $region31: #{conv_block_forward.1} parent=5 // pred_region
      // Predicated region
      $region33: #{conv_block_forward.1} parent=31 // pred_check
        %p206 = pneg %p33
      $region34: #{conv_block_forward.1} parent=31 // pred_check_branch
        %208 = sbr.rel (%p206) target = $region36
      $region35: #{conv_block_forward.1} parent=31 // pred_region
        %p209 = scmp.lt.s32.totalorder %s13, 1
        %s210 = scalar_select %p209, %s13, 1
        %s211 = smul.addr %s210, 2
        %s212 = smul.addr %s211, 4
        %s213 = scalar_lea.vmem %s0, %s212
      $region36: #{conv_block_forward.1} parent=31 // pred_fallthru
        _
    $region32: #{conv_block_forward.1} parent=5 // pred_fallthru
      _
    %p214 = scmp.le.s32.totalorder 1, %s13
    %p215 = scmp.lt.s32.totalorder %s13, 3
    %p216 = pnand %p214, %p215
    %p217 = pneg %p216
    // Predicated region
    $region37: #{conv_block_forward.1} parent=5 // pred_check
      _
    $region38: #{conv_block_forward.1} parent=5 // pred_check_branch
      %219 = sbr.rel (%p216) target = $region40
    $region39: #{conv_block_forward.1} parent=5 // pred_region
      %s220 = ssub.s32 %s13, 1
      %p221 = scmp.lt.s32.totalorder %s18, 1
      %s222 = scalar_select %p221, %s18, 1
      %s223 = smul.addr %s222, 2
      %s224 = smul.addr %s223, 4
      %s225 = scalar_lea.vmem %s0, %s224
      %p226 = pneg %p39
      %p227 = pneg %p36
      %p228 = pneg %p60
      %p229 = pneg %p57
      %p230 = pneg %p81
      %p231 = pneg %p78
      %p232 = pneg %p102
      %p233 = pneg %p99
      %p234 = pneg %p123
      %p235 = pneg %p120
      %p236 = pneg %p149
      %p237 = pneg %p146
      %p238 = scmp.lt.s32.totalorder %s18, 1
      %s239 = scalar_select %p238, %s18, 1
      %s240 = smul.addr %s239, 2
      %s241 = smul.addr %s240, 8
      %s242 = scalar_lea.vmem %s5, %s241
      %p243 = pneg %p175
      %p244 = pneg %p172
      %p245 = scmp.lt.s32.totalorder %s18, 1
      %s246 = scalar_select %p245, %s18, 1
      %s247 = smul.addr %s246, 8
      %s248 = scalar_lea.vmem %s6, %s247
      %p249 = scmp.lt.s32.totalorder %s18, 1
      %s250 = scalar_select %p249, %s18, 1
      %s251 = smul.addr %s250, 2
      %s252 = smul.addr %s251, 4
      %s253 = scalar_lea.vmem %s0, %s252
      %p254 = scmp.lt.s32.totalorder %s18, 1
      %s255 = scalar_select %p254, %s18, 1
      %s256 = smul.addr %s255, 2
      %s257 = smul.addr %s256, 8
      %s258 = scalar_lea.vmem %s5, %s257
      %p259 = scmp.lt.s32.totalorder %s18, 1
      %s260 = scalar_select %p259, %s18, 1
      %s261 = smul.addr %s260, 8
      %s262 = scalar_lea.vmem %s6, %s261
      %v263 = vld [vmem:[%s4] sm:$0xff]
      %v264 = vld [vmem:[%s4 + $0x8] sm:$0xff]
      %v265 = vld [vmem:[%s4 + $0x10] sm:$0x1]
      %v266 = vld [vmem:[%s4 + $0x18] sm:$0x1]
      %v267 = vld [vmem:[%s3] sm:$0xff]
      %v268 = vld [vmem:[%s253] sm:$0xff]
      %v270 = vcombine.high %v268, %v268
      %272 = vrot.lane.b32.xlu0 %v268, 17
      %v273 = vpop.permute.xlu0 %272
      %274 = vrot.lane.b32.xlu0 %v270, 17
      %v275 = vpop.permute.xlu0 %274
      %v276 = vlaneseq
      %v277 = vand.u32 %v276, 127
      %vm278 = vcmp.lt.s32.totalorder %v277, 17
      %v279 = vsel %vm278, %v273, %v275
      %v280 = vsel %vm278, %v275, %v273
      %v281 = vlaneseq
      %v282 = vshrl.u32 %v281, 7
      %v283 = vsub.s32 0, %v282
      %v284 = vrot.slane %v263, %v283
      %v285 = vlaneseq
      %v286 = vshrl.u32 %v285, 7
      %v287 = vsub.s32 0, %v286
      %v288 = vrot.slane %v264, %v287
      %v289 = vmul.f32 %v280, %v284
      %v290 = vmul.f32 %v279, %v288
      %291 = vst [vmem:[#allocation2] sm:$0xf] %v289
      %292 = vst [vmem:[#allocation2 + $0x8] sm:$0xf] %v290
      %293 = vrot.lane.b32.xlu0 %v268, 16
      %v294 = vpop.permute.xlu0 %293
      %295 = vrot.lane.b32.xlu0 %v270, 16
      %v296 = vpop.permute.xlu0 %295
      %vm297 = vcmp.lt.s32.totalorder %v277, 16
      %v298 = vsel %vm297, %v294, %v296
      %v299 = vsel %vm297, %v296, %v294
      %v300 = vlaneseq
      %v301 = vshrl.u32 %v300, 7
      %v302 = vsub.s32 1, %v301
      %v303 = vrot.slane %v263, %v302
      %v304 = vlaneseq
      %v305 = vshrl.u32 %v304, 7
      %v306 = vsub.s32 1, %v305
      %v307 = vrot.slane %v264, %v306
      %v308 = vmul.f32 %v299, %v303
      %v309 = vmul.f32 %v298, %v307
      %v312 = vrot.slane %v308, 4
      %v313 = vrot.slane %v309, 4
      %316 = vst [vmem:[#allocation2] sm:$0xf0] %v312
      %317 = vst [vmem:[#allocation2 + $0x8] sm:$0xf0] %v313
      %318 = vrot.lane.b32.xlu0 %v268, 15
      %v319 = vpop.permute.xlu0 %318
      %320 = vrot.lane.b32.xlu0 %v270, 15
      %v321 = vpop.permute.xlu0 %320
      %vm322 = vcmp.lt.s32.totalorder %v277, 15
      %v323 = vsel %vm322, %v319, %v321
      %v324 = vsel %vm322, %v321, %v319
      %v325 = vlaneseq
      %v326 = vshrl.u32 %v325, 7
      %v327 = vsub.s32 2, %v326
      %v328 = vrot.slane %v263, %v327
      %v329 = vlaneseq
      %v330 = vshrl.u32 %v329, 7
      %v331 = vsub.s32 2, %v330
      %v332 = vrot.slane %v264, %v331
      %v333 = vmul.f32 %v324, %v328
      %v334 = vmul.f32 %v323, %v332
      %335 = vst [vmem:[#allocation2 + $0x10] sm:$0xf] %v333
      %336 = vst [vmem:[#allocation2 + $0x18] sm:$0xf] %v334
      %337 = vrot.lane.b32.xlu0 %v268, 1
      %v338 = vpop.permute.xlu0 %337
      %339 = vrot.lane.b32.xlu0 %v270, 1
      %v340 = vpop.permute.xlu0 %339
      %vm341 = vcmp.lt.s32.totalorder %v277, 1
      %v342 = vsel %vm341, %v338, %v340
      %v343 = vsel %vm341, %v340, %v338
      %v344 = vlaneseq
      %v345 = vshrl.u32 %v344, 7
      %v346 = vsub.s32 3, %v345
      %v347 = vrot.slane %v263, %v346
      %v348 = vlaneseq
      %v349 = vshrl.u32 %v348, 7
      %v350 = vsub.s32 3, %v349
      %v351 = vrot.slane %v264, %v350
      %v352 = vmul.f32 %v343, %v347
      %v353 = vmul.f32 %v342, %v351
      %v356 = vrot.slane %v352, 4
      %v357 = vrot.slane %v353, 4
      %360 = vst [vmem:[#allocation2 + $0x10] sm:$0xf0] %v356
      %361 = vst [vmem:[#allocation2 + $0x18] sm:$0xf0] %v357
      %362 = vst [vmem:[#allocation2 + $0x20] sm:$0xf] %v268
      %363 = vst [vmem:[#allocation2 + $0x28] sm:$0xf] %v270
      %364 = vrot.lane.b32.xlu0 %v268, 127
      %v365 = vpop.permute.xlu0 %364
      %366 = vrot.lane.b32.xlu0 %v270, 127
      %v367 = vpop.permute.xlu0 %366
      %vm368 = vcmp.lt.s32.totalorder %v277, 127
      %v369 = vsel %vm368, %v365, %v367
      %v370 = vsel %vm368, %v367, %v365
      %v371 = vlaneseq
      %v372 = vshrl.u32 %v371, 7
      %v373 = vsub.s32 5, %v372
      %v374 = vrot.slane %v263, %v373
      %v375 = vlaneseq
      %v376 = vshrl.u32 %v375, 7
      %v377 = vsub.s32 5, %v376
      %v378 = vrot.slane %v264, %v377
      %v379 = vmul.f32 %v369, %v374
      %v380 = vmul.f32 %v370, %v378
      %v383 = vrot.slane %v379, 4
      %v384 = vrot.slane %v380, 4
      %387 = vst [vmem:[#allocation2 + $0x20] sm:$0xf0] %v383
      %388 = vst [vmem:[#allocation2 + $0x28] sm:$0xf0] %v384
      %389 = vrot.lane.b32.xlu0 %v268, 113
      %v390 = vpop.permute.xlu0 %389
      %391 = vrot.lane.b32.xlu0 %v270, 113
      %v392 = vpop.permute.xlu0 %391
      %vm393 = vcmp.lt.s32.totalorder %v277, 113
      %v394 = vsel %vm393, %v390, %v392
      %v395 = vsel %vm393, %v392, %v390
      %v396 = vlaneseq
      %v397 = vshrl.u32 %v396, 7
      %v398 = vsub.s32 6, %v397
      %v399 = vrot.slane %v263, %v398
      %v400 = vlaneseq
      %v401 = vshrl.u32 %v400, 7
      %v402 = vsub.s32 6, %v401
      %v403 = vrot.slane %v264, %v402
      %v404 = vmul.f32 %v394, %v399
      %v405 = vmul.f32 %v395, %v403
      %406 = vst [vmem:[#allocation2 + $0x30] sm:$0xf] %v404
      %407 = vst [vmem:[#allocation2 + $0x38] sm:$0xf] %v405
      %408 = vrot.lane.b32.xlu0 %v268, 112
      %v409 = vpop.permute.xlu0 %408
      %410 = vrot.lane.b32.xlu0 %v270, 112
      %v411 = vpop.permute.xlu0 %410
      %vm412 = vcmp.lt.s32.totalorder %v277, 112
      %v413 = vsel %vm412, %v409, %v411
      %v414 = vsel %vm412, %v411, %v409
      %v415 = vlaneseq
      %v416 = vshrl.u32 %v415, 7
      %v417 = vsub.s32 7, %v416
      %v418 = vrot.slane %v263, %v417
      %v419 = vlaneseq
      %v420 = vshrl.u32 %v419, 7
      %v421 = vsub.s32 7, %v420
      %v422 = vrot.slane %v264, %v421
      %v423 = vmul.f32 %v413, %v418
      %v424 = vmul.f32 %v414, %v422
      %v427 = vrot.slane %v423, 4
      %v428 = vrot.slane %v424, 4
      %431 = vst [vmem:[#allocation2 + $0x30] sm:$0xf0] %v427
      %432 = vst [vmem:[#allocation2 + $0x38] sm:$0xf0] %v428
      %433 = vrot.lane.b32.xlu0 %v268, 111
      %v434 = vpop.permute.xlu0 %433
      %435 = vrot.lane.b32.xlu0 %v270, 111
      %v436 = vpop.permute.xlu0 %435
      %vm437 = vcmp.lt.s32.totalorder %v277, 111
      %v438 = vsel %vm437, %v434, %v436
      %v439 = vsel %vm437, %v436, %v434
      %v440 = vlaneseq
      %v441 = vshrl.u32 %v440, 7
      %v442 = vsub.s32 0, %v441
      %v443 = vrot.slane %v265, %v442
      %v444 = vlaneseq
      %v445 = vshrl.u32 %v444, 7
      %v446 = vsub.s32 0, %v445
      %v447 = vrot.slane %v266, %v446
      %v448 = vmul.f32 %v438, %v443
      %v449 = vmul.f32 %v439, %v447
      %450 = vst [vmem:[#allocation2 + $0x40] sm:$0xf] %v448
      %451 = vst [vmem:[#allocation2 + $0x48] sm:$0xf] %v449
      %v452 = vld [vmem:[%s1] sm:$0xff]
      %v453 = vld [vmem:[#allocation2] sm:$0xff]
      %v454 = vld [vmem:[#allocation2 + $0x8] sm:$0xff]
      %v455 = vld [vmem:[#allocation2 + $0x10] sm:$0xff]
      %v456 = vld [vmem:[#allocation2 + $0x18] sm:$0xff]
      %v457 = vld [vmem:[#allocation2 + $0x20] sm:$0xff]
      %v458 = vld [vmem:[#allocation2 + $0x28] sm:$0xff]
      %v459 = vld [vmem:[#allocation2 + $0x30] sm:$0xff]
      %v460 = vld [vmem:[#allocation2 + $0x38] sm:$0xff]
      %v461 = vld [vmem:[#allocation2 + $0x40] sm:$0xf]
      %v462 = vld [vmem:[#allocation2 + $0x48] sm:$0xf]
      %464 = vset.pattern.permute.xlu0 0
      %465 = vperm.xlu0 %464, %v267
      %v466 = vpop.permute.xlu0 %465
      %vm468 = vcmask 293888
      %v470 = vsel %vm468, %v452, 0
      %vm472 = vcmask 1043456
      %v474 = vsel %vm472, %v461, 0
      %v477 = vsel %vm472, %v462, 0
      %479 = vmatprep.subr.mxu0 %v454
      %480 = vmatpush1.msra.mxu0 %v453
      %481 = vmatprep.subr.mxu0 %v456
      %482 = vmatpush1.msra.mxu0 %v455
      %483 = vmatprep.subr.mxu0 %v458
      %484 = vmatpush1.msra.mxu0 %v457
      %485 = vmatprep.subr.mxu0 %v460
      %486 = vmatpush1.msra.mxu0 %v459
      %487 = vmatprep.subr.mxu0 %v477
      %488 = vmatpush1.msra.mxu0 %v474
      %489 = vmatprep.subr.mxu0 0.0
      %490 = vmatpush1.msra.mxu0 0.0
      %491 = vmatprep.subr.mxu0 0.0
      %492 = vmatpush1.msra.mxu0 0.0
      %493 = vmatprep.subr.mxu0 0.0
      %494 = vmatpush1.msra.mxu0 0.0
      %495 = vmatprep.subr.mxu0 0.0
      %496 = vmatpush1.msra.mxu0 0.0
      %497 = vmatprep.subr.mxu0 0.0
      %498 = vmatpush1.msra.mxu0 0.0
      %499 = vmatprep.subr.mxu0 0.0
      %500 = vmatpush1.msra.mxu0 0.0
      %501 = vmatprep.subr.mxu0 0.0
      %502 = vmatpush1.msra.mxu0 0.0
      %503 = vmatprep.subr.mxu0 0.0
      %504 = vmatpush1.msra.mxu0 0.0
      %505 = vmatprep.subr.mxu0 0.0
      %506 = vmatpush1.msra.mxu0 0.0
      %507 = vmatprep.subr.mxu0 0.0
      %508 = vmatpush1.msra.mxu0 0.0
      %509 = vmatprep.subr.mxu0 0.0
      %510 = vmatpush1.msra.mxu0 0.0
      %511 = vmatprep.subr.mxu0 0.0
      %512 = vmatpush1.msra.mxu0 0.0
      %513 = vmatprep.subr.mxu0 0.0
      %514 = vmatpush1.msra.mxu0 0.0
      %515 = vmatprep.subr.mxu0 0.0
      %516 = vmatpush1.msra.mxu0 0.0
      %517 = vmatprep.subr.mxu0 0.0
      %518 = vmatpush1.msra.mxu0 0.0
      %519 = vmatprep.subr.mxu0 0.0
      %520 = vmatpush1.msra.mxu0 0.0
      %521 = vmatprep.subr.mxu0 0.0
      %522 = vmatpush1.msra.mxu0 0.0
      %523 = vmatprep.subr.mxu0 0.0
      %524 = vmatpush1.msra.mxu0 0.0
      %525 = vmatprep.subr.mxu0 0.0
      %526 = vmatpush1.msra.mxu0 0.0
      %527 = vmatprep.subr.mxu0 0.0
      %528 = vmatpush1.msra.mxu0 0.0
      %529 = vmatprep.subr.mxu0 0.0
      %530 = vmatpush1.msra.mxu0 0.0
      %531 = vmatprep.subr.mxu0 0.0
      %532 = vmatpush1.msra.mxu0 0.0
      %533 = vmatprep.subr.mxu0 0.0
      %534 = vmatpush1.msra.mxu0 0.0
      %535 = vmatprep.subr.mxu0 0.0
      %536 = vmatpush1.msra.mxu0 0.0
      %537 = vmatprep.subr.mxu0 0.0
      %538 = vmatpush1.msra.mxu0 0.0
      %539 = vmatprep.subr.mxu0 0.0
      %540 = vmatpush1.msra.mxu0 0.0
      %541 = vmatprep.subr.mxu0 0.0
      %542 = vmatpush1.msra.mxu0 0.0
      %543 = vmatprep.mubr.f32.mxu0 0.0
      %544 = vmatmul.mubr.f32.gmra.mrb[0].mxu0 %v470
      %v545 = vpop.f32.mrb[0].mxu0
      %v546 = vadd.f32 %v466, %v545
      %v547 = vpop.f32.mrb[0].mxu0
      %v548 = vadd.f32 %v466, %v547
      %549 = vdwg.mxu0
      %v550 = vmax.f32 %v546, 0.0
      %v551 = vmax.f32 %v548, 0.0
      %552 = vset.pattern.permute.xlu0 1
      %553 = vperm.xlu0 %552, %v267
      %v554 = vpop.permute.xlu0 %553
      %v556 = vmul.f32 %v550, %v554
      %v557 = vmul.f32 %v551, %v554
      %558 = vset.pattern.permute.xlu0 2
      %559 = vperm.xlu0 %558, %v267
      %v560 = vpop.permute.xlu0 %559
      %v562 = vadd.f32 %v556, %v560
      %v563 = vadd.f32 %v557, %v560
      %564 = vrot.lane.b32.xlu0 %v562, 17
      %v565 = vpop.permute.xlu0 %564
      %566 = vrot.lane.b32.xlu0 %v563, 17
      %v567 = vpop.permute.xlu0 %566
      %v568 = vsel %vm278, %v565, %v567
      %v569 = vsel %vm278, %v567, %v565
      %v570 = vmul.f32 %v569, %v284
      %v571 = vmul.f32 %v568, %v288
      %572 = vst [vmem:[#allocation3] sm:$0xff] %v570
      %573 = vst [vmem:[#allocation3 + $0x8] sm:$0xff] %v571
      %574 = vrot.lane.b32.xlu0 %v562, 16
      %v575 = vpop.permute.xlu0 %574
      %576 = vrot.lane.b32.xlu0 %v563, 16
      %v577 = vpop.permute.xlu0 %576
      %v578 = vsel %vm297, %v575, %v577
      %v579 = vsel %vm297, %v577, %v575
      %v580 = vmul.f32 %v579, %v303
      %v581 = vmul.f32 %v578, %v307
      %582 = vst [vmem:[#allocation3 + $0x10] sm:$0xff] %v580
      %583 = vst [vmem:[#allocation3 + $0x18] sm:$0xff] %v581
      %584 = vrot.lane.b32.xlu0 %v562, 15
      %v585 = vpop.permute.xlu0 %584
      %586 = vrot.lane.b32.xlu0 %v563, 15
      %v587 = vpop.permute.xlu0 %586
      %v588 = vsel %vm322, %v585, %v587
      %v589 = vsel %vm322, %v587, %v585
      %v590 = vmul.f32 %v589, %v328
      %v591 = vmul.f32 %v588, %v332
      %592 = vst [vmem:[#allocation3 + $0x20] sm:$0xff] %v590
      %593 = vst [vmem:[#allocation3 + $0x28] sm:$0xff] %v591
      %594 = vrot.lane.b32.xlu0 %v562, 1
      %v595 = vpop.permute.xlu0 %594
      %596 = vrot.lane.b32.xlu0 %v563, 1
      %v597 = vpop.permute.xlu0 %596
      %v598 = vsel %vm341, %v595, %v597
      %v599 = vsel %vm341, %v597, %v595
      %v600 = vmul.f32 %v599, %v347
      %v601 = vmul.f32 %v598, %v351
      %602 = vst [vmem:[#allocation3 + $0x30] sm:$0xff] %v600
      %603 = vst [vmem:[#allocation3 + $0x38] sm:$0xff] %v601
      %604 = vst [vmem:[#allocation3 + $0x40] sm:$0xff] %v562
      %605 = vst [vmem:[#allocation3 + $0x48] sm:$0xff] %v563
      %606 = vrot.lane.b32.xlu0 %v562, 127
      %v607 = vpop.permute.xlu0 %606
      %608 = vrot.lane.b32.xlu0 %v563, 127
      %v609 = vpop.permute.xlu0 %608
      %v610 = vsel %vm368, %v607, %v609
      %v611 = vsel %vm368, %v609, %v607
      %v612 = vmul.f32 %v610, %v374
      %v613 = vmul.f32 %v611, %v378
      %614 = vst [vmem:[#allocation3 + $0x50] sm:$0xff] %v612
      %615 = vst [vmem:[#allocation3 + $0x58] sm:$0xff] %v613
      %616 = vrot.lane.b32.xlu0 %v562, 113
      %v617 = vpop.permute.xlu0 %616
      %618 = vrot.lane.b32.xlu0 %v563, 113
      %v619 = vpop.permute.xlu0 %618
      %v620 = vsel %vm393, %v617, %v619
      %v621 = vsel %vm393, %v619, %v617
      %v622 = vmul.f32 %v620, %v399
      %v623 = vmul.f32 %v621, %v403
      %624 = vst [vmem:[#allocation3 + $0x60] sm:$0xff] %v622
      %625 = vst [vmem:[#allocation3 + $0x68] sm:$0xff] %v623
      %626 = vrot.lane.b32.xlu0 %v562, 112
      %v627 = vpop.permute.xlu0 %626
      %628 = vrot.lane.b32.xlu0 %v563, 112
      %v629 = vpop.permute.xlu0 %628
      %v630 = vsel %vm412, %v627, %v629
      %v631 = vsel %vm412, %v629, %v627
      %v632 = vmul.f32 %v630, %v418
      %v633 = vmul.f32 %v631, %v422
      %634 = vst [vmem:[#allocation3 + $0x70] sm:$0xff] %v632
      %635 = vst [vmem:[#allocation3 + $0x78] sm:$0xff] %v633
      %636 = vrot.lane.b32.xlu0 %v562, 111
      %v637 = vpop.permute.xlu0 %636
      %638 = vrot.lane.b32.xlu0 %v563, 111
      %v639 = vpop.permute.xlu0 %638
      %v640 = vsel %vm437, %v637, %v639
      %v641 = vsel %vm437, %v639, %v637
      %v642 = vmul.f32 %v640, %v443
      %v643 = vmul.f32 %v641, %v447
      %644 = vst [vmem:[#allocation3 + $0x80] sm:$0xff] %v642
      %645 = vst [vmem:[#allocation3 + $0x88] sm:$0xff] %v643
      %v646 = vld [vmem:[%s2] sm:$0xff]
      %v647 = vld [vmem:[#allocation3] sm:$0xff]
      %v648 = vld [vmem:[#allocation3 + $0x8] sm:$0xff]
      %v649 = vld [vmem:[#allocation3 + $0x10] sm:$0xff]
      %v650 = vld [vmem:[#allocation3 + $0x18] sm:$0xff]
      %v651 = vld [vmem:[#allocation3 + $0x20] sm:$0xff]
      %v652 = vld [vmem:[#allocation3 + $0x28] sm:$0xff]
      %v653 = vld [vmem:[#allocation3 + $0x30] sm:$0xff]
      %v654 = vld [vmem:[#allocation3 + $0x38] sm:$0xff]
      %v655 = vld [vmem:[#allocation3 + $0x40] sm:$0xff]
      %v656 = vld [vmem:[#allocation3 + $0x48] sm:$0xff]
      %v657 = vld [vmem:[#allocation3 + $0x50] sm:$0xff]
      %v658 = vld [vmem:[#allocation3 + $0x58] sm:$0xff]
      %v659 = vld [vmem:[#allocation3 + $0x60] sm:$0xff]
      %v660 = vld [vmem:[#allocation3 + $0x68] sm:$0xff]
      %v661 = vld [vmem:[#allocation3 + $0x70] sm:$0xff]
      %v662 = vld [vmem:[#allocation3 + $0x78] sm:$0xff]
      %v663 = vld [vmem:[#allocation3 + $0x80] sm:$0xff]
      %v664 = vld [vmem:[#allocation3 + $0x88] sm:$0xff]
      %665 = vset.pattern.permute.xlu0 3
      %666 = vperm.xlu0 %665, %v267
      %v667 = vpop.permute.xlu0 %666
      %vm669 = vcmask 588800
      %v671 = vsel %vm669, %v646, 0
      %673 = vmatprep.subr.mxu0 %v648
      %674 = vmatpush1.msra.mxu0 %v647
      %675 = vmatprep.subr.mxu0 %v650
      %676 = vmatpush1.msra.mxu0 %v649
      %677 = vmatprep.subr.mxu0 %v652
      %678 = vmatpush1.msra.mxu0 %v651
      %679 = vmatprep.subr.mxu0 %v654
      %680 = vmatpush1.msra.mxu0 %v653
      %681 = vmatprep.subr.mxu0 %v656
      %682 = vmatpush1.msra.mxu0 %v655
      %683 = vmatprep.subr.mxu0 %v658
      %684 = vmatpush1.msra.mxu0 %v657
      %685 = vmatprep.subr.mxu0 %v660
      %686 = vmatpush1.msra.mxu0 %v659
      %687 = vmatprep.subr.mxu0 %v662
      %688 = vmatpush1.msra.mxu0 %v661
      %689 = vmatprep.subr.mxu0 %v664
      %690 = vmatpush1.msra.mxu0 %v663
      %691 = vmatprep.subr.mxu0 0.0
      %692 = vmatpush1.msra.mxu0 0.0
      %693 = vmatprep.subr.mxu0 0.0
      %694 = vmatpush1.msra.mxu0 0.0
      %695 = vmatprep.subr.mxu0 0.0
      %696 = vmatpush1.msra.mxu0 0.0
      %697 = vmatprep.subr.mxu0 0.0
      %698 = vmatpush1.msra.mxu0 0.0
      %699 = vmatprep.subr.mxu0 0.0
      %700 = vmatpush1.msra.mxu0 0.0
      %701 = vmatprep.subr.mxu0 0.0
      %702 = vmatpush1.msra.mxu0 0.0
      %703 = vmatprep.subr.mxu0 0.0
      %704 = vmatpush1.msra.mxu0 0.0
      %705 = vmatprep.subr.mxu0 0.0
      %706 = vmatpush1.msra.mxu0 0.0
      %707 = vmatprep.subr.mxu0 0.0
      %708 = vmatpush1.msra.mxu0 0.0
      %709 = vmatprep.subr.mxu0 0.0
      %710 = vmatpush1.msra.mxu0 0.0
      %711 = vmatprep.subr.mxu0 0.0
      %712 = vmatpush1.msra.mxu0 0.0
      %713 = vmatprep.subr.mxu0 0.0
      %714 = vmatpush1.msra.mxu0 0.0
      %715 = vmatprep.subr.mxu0 0.0
      %716 = vmatpush1.msra.mxu0 0.0
      %717 = vmatprep.subr.mxu0 0.0
      %718 = vmatpush1.msra.mxu0 0.0
      %719 = vmatprep.subr.mxu0 0.0
      %720 = vmatpush1.msra.mxu0 0.0
      %721 = vmatprep.subr.mxu0 0.0
      %722 = vmatpush1.msra.mxu0 0.0
      %723 = vmatprep.subr.mxu0 0.0
      %724 = vmatpush1.msra.mxu0 0.0
      %725 = vmatprep.subr.mxu0 0.0
      %726 = vmatpush1.msra.mxu0 0.0
      %727 = vmatprep.subr.mxu0 0.0
      %728 = vmatpush1.msra.mxu0 0.0
      %729 = vmatprep.subr.mxu0 0.0
      %730 = vmatpush1.msra.mxu0 0.0
      %731 = vmatprep.subr.mxu0 0.0
      %732 = vmatpush1.msra.mxu0 0.0
      %733 = vmatprep.subr.mxu0 0.0
      %734 = vmatpush1.msra.mxu0 0.0
      %735 = vmatprep.subr.mxu0 0.0
      %736 = vmatpush1.msra.mxu0 0.0
      %737 = vmatprep.mubr.f32.mxu0 0.0
      %738 = vmatmul.mubr.f32.gmra.mrb[0].mxu0 %v671
      %v739 = vpop.f32.mrb[0].mxu0
      %v740 = vadd.f32 %v667, %v739
      %v741 = vpop.f32.mrb[0].mxu0
      %v742 = vadd.f32 %v667, %v741
      %743 = vdwg.mxu0
      %v744 = vmax.f32 %v740, 0.0
      %v745 = vmax.f32 %v742, 0.0
      %746 = vset.pattern.permute.xlu0 4
      %747 = vperm.xlu0 %746, %v267
      %v748 = vpop.permute.xlu0 %747
      %v750 = vmul.f32 %v744, %v748
      %v751 = vmul.f32 %v745, %v748
      %752 = vset.pattern.permute.xlu0 5
      %753 = vperm.xlu0 %752, %v267
      %v754 = vpop.permute.xlu0 %753
      %v756 = vadd.f32 %v750, %v754
      %v757 = vadd.f32 %v751, %v754
      %758 = vst [vmem:[%s258] sm:$0xff] %v756
      %759 = vst [vmem:[%s258 + $0x8] sm:$0xff] %v757
      %760 = vrot.lane.b32.xlu0 %v756, 127
      %v761 = vpop.permute.xlu0 %760
      %762 = vrot.lane.b32.xlu0 %v757, 127
      %v763 = vpop.permute.xlu0 %762
      %v764 = vsel %vm368, %v761, %v763
      %v765 = vsel %vm368, %v763, %v761
      %v766 = vmax.f32 %v756, %v764
      %v767 = vmax.f32 %v757, %v765
      %768 = vrot.lane.b32.xlu0 %v766, 112
      %v769 = vpop.permute.xlu0 %768
      %770 = vrot.lane.b32.xlu0 %v767, 112
      %v771 = vpop.permute.xlu0 %770
      %v772 = vsel %vm412, %v769, %v771
      %v773 = vsel %vm412, %v771, %v769
      %v774 = vmax.f32 %v766, %v772
      %v775 = vmax.f32 %v767, %v773
      %777 = vrot.lane.b32.xlu0 %v774, 112
      %v778 = vpop.permute.xlu0 %777
      %780 = vrot.lane.b32.xlu0 %v774, 96
      %v781 = vpop.permute.xlu0 %780
      %783 = vrot.lane.b32.xlu0 %v774, 80
      %v784 = vpop.permute.xlu0 %783
      %787 = vrot.lane.b32.xlu0 %v775, 64
      %v788 = vpop.permute.xlu0 %787
      %790 = vrot.lane.b32.xlu0 %v775, 48
      %v791 = vpop.permute.xlu0 %790
      %793 = vrot.lane.b32.xlu0 %v775, 32
      %v794 = vpop.permute.xlu0 %793
      %796 = vrot.lane.b32.xlu0 %v775, 16
      %v797 = vpop.permute.xlu0 %796
      %vm799 = vcmask 130048
      %v800 = vsel %vm799, %v774, %v778
      %vm801 = vcmask 261120
      %v802 = vsel %vm801, %v800, %v781
      %vm803 = vcmask 392192
      %v804 = vsel %vm803, %v802, %v784
      %vm805 = vcmask 523264
      %v806 = vsel %vm805, %v804, %v788
      %vm807 = vcmask 654336
      %v808 = vsel %vm807, %v806, %v791
      %vm809 = vcmask 785408
      %v810 = vsel %vm809, %v808, %v794
      %vm811 = vcmask 916480
      %v812 = vsel %vm811, %v810, %v797
      %813 = vst [vmem:[%s262] sm:$0xff] %v812
      %p814 = scmp.lt.s32.totalorder %s18, 1
      %s815 = scalar_select %p814, %s18, 1
      %s816 = smul.addr %s815, 2
      %s817 = smul.addr %s816, 8
      %s818 = scalar_lea.vmem %s5, %s817
      %p819 = scmp.lt.s32.totalorder %s18, 1
      %s820 = scalar_select %p819, %s18, 1
      %s821 = smul.addr %s820, 8
      %s822 = scalar_lea.vmem %s6, %s821
      // Predicated region
      $region41: #{conv_block_forward.1} parent=39 // pred_check
        %p823 = pneg %p146
      $region42: #{conv_block_forward.1} parent=39 // pred_check_branch
        %825 = sbr.rel (%p823) target = $region44
      $region43: #{conv_block_forward.1} parent=39 // pred_region
        _
      $region44: #{conv_block_forward.1} parent=39 // pred_fallthru
        _
      // Predicated region
      $region45: #{conv_block_forward.1} parent=39 // pred_check
        %p826 = pneg %p172
      $region46: #{conv_block_forward.1} parent=39 // pred_check_branch
        %828 = sbr.rel (%p826) target = $region48
      $region47: #{conv_block_forward.1} parent=39 // pred_region
        _
      $region48: #{conv_block_forward.1} parent=39 // pred_fallthru
        _
    $region40: #{conv_block_forward.1} parent=5 // pred_fallthru
      _
    %p829 = scmp.le.s32.totalorder 2, %s13
    // Predicated region
    $region49: #{conv_block_forward.1} parent=5 // pred_check
      %p830 = pneg %p829
    $region50: #{conv_block_forward.1} parent=5 // pred_check_branch
      %832 = sbr.rel (%p830) target = $region52
    $region51: #{conv_block_forward.1} parent=5 // pred_region
      %s833 = ssub.s32 %s13, 2
      // Predicated region
      $region53: #{conv_block_forward.1} parent=51 // pred_check
        %p834 = pneg %p152
      $region54: #{conv_block_forward.1} parent=51 // pred_check_branch
        %836 = sbr.rel (%p834) target = $region56
      $region55: #{conv_block_forward.1} parent=51 // pred_region
        %p837 = scmp.lt.s32.totalorder %s19, 1
        %s838 = scalar_select %p837, %s19, 1
        %s839 = smul.addr %s838, 2
        %s840 = smul.addr %s839, 8
        %s841 = scalar_lea.vmem %s5, %s840
      $region56: #{conv_block_forward.1} parent=51 // pred_fallthru
        _
      // Predicated region
      $region57: #{conv_block_forward.1} parent=51 // pred_check
        %p842 = pneg %p178
      $region58: #{conv_block_forward.1} parent=51 // pred_check_branch
        %844 = sbr.rel (%p842) target = $region60
      $region59: #{conv_block_forward.1} parent=51 // pred_region
        %p845 = scmp.lt.s32.totalorder %s19, 1
        %s846 = scalar_select %p845, %s19, 1
        %s847 = smul.addr %s846, 8
        %s848 = scalar_lea.vmem %s6, %s847
      $region60: #{conv_block_forward.1} parent=51 // pred_fallthru
        _
    $region52: #{conv_block_forward.1} parent=5 // pred_fallthru
      _
  $region6: #{conv_block_forward.1} parent=0 // loop_footer
    %s17 = sadd.s32 1, %s13
  $region7: #{conv_block_forward.1} parent=0 // loop_footer_branch
    %12 = sbr.rel target = $region3
  $region8: #{conv_block_forward.1} parent=0 // loop_exit
    _

</llo_original>
